<compile_context>
chip_gen: v7x
topology: tpu7x:2x2x1
jax: 0.10.0
libtpu: 0.0.40
codegen_flags: <defaults>
</compile_context>

<pallas_src>
import math

import jax
import jax.numpy as jnp
from jax.experimental import pallas as pl
from jax.experimental.pallas import tpu as pltpu


def _build_pe(d_model: int, max_len: int) -> jnp.ndarray:
    """Sinusoidal positional-encoding buffer, shape (1, max_len, d_model). d_model must be even."""
    position = jnp.arange(max_len, dtype=jnp.float32)[:, None]                  # (max_len, 1)
    div_term = jnp.exp(
        jnp.arange(0, d_model, 2, dtype=jnp.float32) * (-math.log(10000.0) / d_model)
    )                                                                            # (d_model/2,)
    angles = position * div_term                                                 # (max_len, d_model/2)
    pe = jnp.zeros((max_len, d_model), dtype=jnp.float32)
    pe = pe.at[:, 0::2].set(jnp.sin(angles))
    pe = pe.at[:, 1::2].set(jnp.cos(angles))
    return pe[None, :, :]                                                        # (1, max_len, d_model)


def _pe_add_kernel(x_ref, pe_ref, o_ref):
    # x_ref / o_ref: (TB, TL) lane-dense tile; pe_ref: (1, TL) row broadcast over
    # the batch rows (sublane broadcast on the VPU).
    o_ref[...] = x_ref[...] + pe_ref[...]


def _pick_lane_tile(L: int) -> int:
    """Largest multiple of 128 (<= 8192 lanes) that divides L, else full extent."""
    if L % 128 != 0:
        return L  # full-extent block is always legal
    for cand in (8192, 4096, 2048, 1024, 512, 256, 128):
        if L % cand == 0:
            return cand
    return 128


def _pick_row_tile(B: int, TL: int, itemsize: int, target_block_bytes: int = 2 * 1024 * 1024) -> int:
    """Largest multiple of 8 dividing B, with TB*TL*itemsize <= ~target; else full extent."""
    if B % 8 != 0:
        return B  # full-extent block is always legal
    max_rows = max(8, target_block_bytes // max(1, TL * itemsize))
    best, t = 8, 8
    while t <= min(B, max_rows):
        if B % t == 0:
            best = t
        t += 8
    return best


def positional_encoding_forward(x: jnp.ndarray, pe: jnp.ndarray,
                                *, min_kernel_bytes: int = 1 << 20,
                                force_kernel: bool = False) -> jnp.ndarray:
    """x: (B, S, D); pe: (1, max_len, D).  Returns x + pe[:, :S]."""
    B, S, D = x.shape
    pe_slice = pe[:, :S, :].astype(x.dtype)            # match dtype -> uniform DMA/compute

    nbytes = x.size * jnp.dtype(x.dtype).itemsize
    if nbytes < min_kernel_bytes and not force_kernel:
        # Tiny inputs: per-grid-step + launch overhead dwarfs the add; XLA wins here.
        return x + pe_slice

    L = S * D
    x2 = x.reshape(B, L)                                # lane-dense 2-D view
    pe2 = pe_slice.reshape(1, L)

    itemsize = jnp.dtype(x.dtype).itemsize
    TL = _pick_lane_tile(L)
    TB = _pick_row_tile(B, TL, itemsize)
    grid = (B // TB, L // TL)

    out2 = pl.pallas_call(
        _pe_add_kernel,
        out_shape=jax.ShapeDtypeStruct((B, L), x.dtype),
        grid_spec=pltpu.PrefetchScalarGridSpec(
            num_scalar_prefetch=0,
            grid=grid,
            in_specs=[
                pl.BlockSpec((TB, TL), lambda i, j: (i, j)),   # x tile
                pl.BlockSpec((1, TL), lambda i, j: (0, j)),    # pe row (broadcast over batch rows)
            ],
            out_specs=pl.BlockSpec((TB, TL), lambda i, j: (i, j)),
        ),
        compiler_params=pltpu.CompilerParams(
            dimension_semantics=("parallel", "parallel"),      # megacore sharding on v7x
            vmem_limit_bytes=32 * 1024 * 1024,                 # ~6 * 2 MiB blocks << limit on all gens
        ),
    )(x2, pe2)
    return out2.reshape(B, S, D)


if __name__ == "__main__":
    # Module config: d_model=32, max_len=128 (dropout p=0.0 => identity).
    d_model, max_len = 32, 128
    pe = _build_pe(d_model, max_len)

    # Small shapes consistent with the module: batch=2, seq=8, hidden=32.
    key = jax.random.PRNGKey(0)
    x_small = jax.random.normal(key, (2, 8, d_model), dtype=jnp.float32)
    out_small = jax.block_until_ready(
        positional_encoding_forward(x_small, pe, force_kernel=True))   # exercise the Pallas kernel
    ref_small = x_small + pe[:, :8, :]
    assert out_small.shape == x_small.shape
    assert jnp.allclose(out_small, ref_small, atol=1e-6, rtol=1e-6)

    # Larger config: hits the lane-dense multi-block tiling path (grid=(2,1), 128x4096 f32 blocks).
    x_big = jax.random.normal(jax.random.PRNGKey(1), (256, max_len, d_model), dtype=jnp.float32)
    out_big = jax.block_until_ready(positional_encoding_forward(x_big, pe))
    ref_big = x_big + pe[:, :max_len, :]
    assert jnp.allclose(out_big, ref_big, atol=1e-6, rtol=1e-6)

    # Tiny-shape fallback path (plain fused XLA add).
    out_fb = jax.block_until_ready(positional_encoding_forward(x_small, pe))
    assert jnp.allclose(out_fb, ref_small, atol=1e-6, rtol=1e-6)

    print("KERNEL_OK")
</pallas_src>

<mosaic_0001>
module attributes {stable_mosaic.version = 11 : i64} {
  func.func @_pe_add_kernel(%arg0: i32, %arg1: i32, %arg2: memref<2x256xf32, #tpu.memory_space<vmem>>, %arg3: memref<1x256xf32, #tpu.memory_space<vmem>>, %arg4: memref<2x256xf32, #tpu.memory_space<vmem>>) attributes {dimension_semantics = [#tpu.dimension_semantics<parallel>, #tpu.dimension_semantics<parallel>], iteration_bounds = array<i64: 1, 1>, scalar_prefetch = 0 : i64, scratch_operands = 0 : i64, tpu.core_type = #tpu.core_type<tc>, window_params = [{transform_indices = @transform_0, window_bounds = array<i64: 2, 256>}, {transform_indices = @transform_1, window_bounds = array<i64: 1, 256>}, {transform_indices = @transform_2, window_bounds = array<i64: 2, 256>}]} {
    %c0 = arith.constant 0 : index
    %c0_0 = arith.constant 0 : index
    %0 = vector.load %arg2[%c0, %c0_0] : memref<2x256xf32, #tpu.memory_space<vmem>>, vector<2x256xf32>
    %c0_1 = arith.constant 0 : index
    %c0_2 = arith.constant 0 : index
    %1 = vector.load %arg3[%c0_1, %c0_2] : memref<1x256xf32, #tpu.memory_space<vmem>>, vector<1x256xf32>
    %2 = vector.broadcast %1 : vector<1x256xf32> to vector<2x256xf32>
    %3 = arith.addf %0, %2 : vector<2x256xf32>
    %c0_3 = arith.constant 0 : index
    %c0_4 = arith.constant 0 : index
    %4 = vector.load %arg4[%c0_3, %c0_4] : memref<2x256xf32, #tpu.memory_space<vmem>>, vector<2x256xf32>
    tpu.vector_store %arg4[%c0_3, %c0_4], %3 {strides = array<i32>} : memref<2x256xf32, #tpu.memory_space<vmem>>, vector<2x256xf32>,
    return
  }
  func.func @transform_0(%arg0: i32, %arg1: i32) -> (i32, i32) {
    %c0_i32 = arith.constant 0 : i32
    return %arg0, %arg1 : i32, i32
  }
  func.func @transform_1(%arg0: i32, %arg1: i32) -> (i32, i32) {
    %c0_i32 = arith.constant 0 : i32
    %c0_i32_0 = arith.constant 0 : i32
    return %c0_i32, %arg1 : i32, i32
  }
  func.func @transform_2(%arg0: i32, %arg1: i32) -> (i32, i32) {
    %c0_i32 = arith.constant 0 : i32
    return %arg0, %arg1 : i32, i32
  }
}

</mosaic_0001>

<llo_original>
// kernel: tpu_custom_call.1
$region0: #{tpu_custom_call.1}
  #allocation0 [shape = 'u32[]', space=smem, size = 0x4, offset = 0x4, fixed_abs, tag = 'smem constant byte address 0x4 - core index']
  #allocation1 [shape = 'u32[144,128]{1,0:T(1,128)}', space=vmem, size = 0x12000, scoped, tag = 'internal scratch']
  %s0 = inlined_call_operand.hbm [shape: f32[2,256], index: 0, kind: input, shape index: {}]
  %s1 = inlined_call_operand.vmem [shape: f32[1,256], index: 1, kind: input, shape index: {}]
  %s2 = inlined_call_operand.hbm [shape: f32[2,256], index: 2, kind: output, shape index: {}]
  %s3 = sld [smem:[#allocation0]]
  $region22: #{tpu_custom_call.1} parent=0
    _
  %s5 = ssub.s32 1, %s3
  %s6 = scalar_select 0, %s5, %s3
  $region1: #{tpu_custom_call.1} parent=0
    #allocation2 [shape = 'u8[2048]{0}', space=vmem, size = 0x800, scoped, tag = 'input window, operand 0, single buffered']
    #allocation3 [shape = 's32[1]{0}', space=sflag, size = 0x4, scoped, tag = 'scoped memory for tpu_custom_call.1']
    #allocation4 [shape = 's32[1]{0}', space=sflag, size = 0x4, scoped, tag = 'scoped memory for tpu_custom_call.1']
    #allocation5 [shape = 'u8[2048]{0}', space=vmem, size = 0x800, scoped, tag = 'output window, operand 0, single buffered']
    %7 = vsyncpa [#allocation3], 0
    %8 = vsyncpa [#allocation4], 0
    // Predicated region
    $region2: #{tpu_custom_call.1} parent=1 // pred_check
      _
    $region3: #{tpu_custom_call.1} parent=1 // pred_check_branch
      %10 = sbr.rel (0) target = $region5
    $region4: #{tpu_custom_call.1} parent=1 // pred_region
      %s12 = ssub.s32 64, 64
      %13 = vsyncadd [#allocation3], %s12
      %s15 = sshll.u32 [#allocation2], 4
      %s16 = int_to_ptr.vmem [resolvable:$true] %s15
      %18 = dma.hbm_to_vmem [thread:$0]  %s0, 64, %s16, [#allocation3]
    $region5: #{tpu_custom_call.1} parent=1 // pred_fallthru
      _
    // Predicated region
    $region6: #{tpu_custom_call.1} parent=1 // pred_check
      _
    $region7: #{tpu_custom_call.1} parent=1 // pred_check_branch
      %20 = sbr.rel (0) target = $region9
    $region8: #{tpu_custom_call.1} parent=1 // pred_region
      _
    $region9: #{tpu_custom_call.1} parent=1 // pred_fallthru
      _
    // Predicated region
    $region10: #{tpu_custom_call.1} parent=1 // pred_check
      _
    $region11: #{tpu_custom_call.1} parent=1 // pred_check_branch
      %22 = sbr.rel (0) target = $region13
    $region12: #{tpu_custom_call.1} parent=1 // pred_region
      %23 = dma.done [#allocation3], 64
    $region13: #{tpu_custom_call.1} parent=1 // pred_fallthru
      _
    %v24 = vld [vmem:[#allocation2] sm:$0xf]
    %v25 = vld [vmem:[%s1] sm:$0x3]
    %v27 = vlaneseq
    %v28 = vshrl.u32 %v27, 7
    %v29 = vsub.s32 0, %v28
    %v30 = vrot.slane %v25, %v29
    %v31 = vlaneseq
    %v32 = vshrl.u32 %v31, 7
    %v33 = vsub.s32 1, %v32
    %v34 = vrot.slane %v25, %v33
    %v35 = vcombine.low %v30, %v34
    %v37 = vunpack.c.l.s4 1983009808
    %v38 = vunpack.c.0.s8 %v37
    %v39 = vlaneseq
    %v40 = vshrl.u32 %v39, 7
    %v41 = vsub.s32 %v38, %v40
    %v42 = vrot.slane %v35, %v41
    %v44 = vadd.f32 %v24, %v42
    %45 = vst [vmem:[#allocation5] sm:$0xf] %v44
    // Predicated region
    $region14: #{tpu_custom_call.1} parent=1 // pred_check
      _
    $region15: #{tpu_custom_call.1} parent=1 // pred_check_branch
      %47 = sbr.rel (0) target = $region17
    $region16: #{tpu_custom_call.1} parent=1 // pred_region
      %s49 = ssub.s32 64, 64
      %50 = vsyncadd [#allocation4], %s49
      %s52 = sshll.u32 [#allocation5], 4
      %s53 = int_to_ptr.vmem [resolvable:$true] %s52
      %55 = dma.vmem_to_hbm [thread:$0]  %s53, 64, %s2, [#allocation4]
    $region17: #{tpu_custom_call.1} parent=1 // pred_fallthru
      _
    // Predicated region
    $region18: #{tpu_custom_call.1} parent=1 // pred_check
      _
    $region19: #{tpu_custom_call.1} parent=1 // pred_check_branch
      %57 = sbr.rel (0) target = $region21
    $region20: #{tpu_custom_call.1} parent=1 // pred_region
      %58 = dma.done [#allocation4], 64
    $region21: #{tpu_custom_call.1} parent=1 // pred_fallthru
      _
    %59 = vsyncpa [#allocation3], 1
    %60 = vsyncpa [#allocation4], 1

</llo_original>
